<compile_context>
chip_gen: v7x
topology: tpu7x:2x2x1
jax: 0.10.0
libtpu: 0.0.40
codegen_flags: <defaults>
</compile_context>

<pallas_src>
from typing import NamedTuple, Optional

import numpy as np
import jax
import jax.numpy as jnp
from jax.experimental import pallas as pl
from jax.experimental.pallas import tpu as pltpu


def _round_up(x: int, m: int) -> int:
    return ((x + m - 1) // m) * m


class SparseTensor(NamedTuple):
    metadata: Optional[object]     # TODO(synk): scn.Metadata is a C++ hash-map handle; no JAX equivalent.
    spatial_size: jnp.ndarray
    features: jnp.ndarray


# ---------------------------------------------------------------------------
# Pallas kernel: scatter-add of (sorted) point features into unique-coord rows.
#   out[m, :] = sum_i [idx[i] == m] * features[i, :]
# Implemented as a one-hot matmul so the reduction runs on the MXU.
# Grid: (M tiles [parallel], per-tile reduction steps [arbitrary]).
# Scalar-prefetch args: flattened per-(i, k) feature-block table and per-tile
# active-block counts (points are pre-sorted by destination row on the host).
# ---------------------------------------------------------------------------
def _scatter_add_kernel(tbl_ref, nblk_ref, idx_ref, feat_ref, out_ref):
    i = pl.program_id(0)          # output-row (M) tile
    k = pl.program_id(1)          # reduction step within this tile's segment
    tm = out_ref.shape[0]
    tn = idx_ref.shape[1]

    @pl.when(k == 0)
    def _():
        # Output block is resident across k (same block index); accumulate
        # directly into it instead of a separate VMEM scratch.
        out_ref[...] = jnp.zeros_like(out_ref)

    @pl.when(k < nblk_ref[i])
    def _():
        # Row-index iota regenerated inline each step: cheap VALU work that
        # co-issues under the MXU (no (tm, tn) scratch, no vld traffic).
        row_iota = jax.lax.broadcasted_iota(jnp.int32, (tm, tn), 0)
        # Shift point->row indices into this tile's local frame.  Padded points
        # (idx = -1) and rows owned by other M tiles fall outside [0, tm) and
        # never match.
        idx_local = idx_ref[...] - i * tm                              # (1, tn)
        onehot = (row_iota == idx_local).astype(feat_ref.dtype)        # (tm, tn)
        out_ref[...] += jnp.dot(onehot, feat_ref[...],
                                preferred_element_type=jnp.float32)


def scatter_add_pallas(inv_idx: np.ndarray, feats: jnp.ndarray, num_unique: int,
                       *, tm: int = 512, tn: int = 512) -> jnp.ndarray:
    """inv_idx: (N,) int32 point->unique-row map; feats: (N, C) float.

    Returns the (num_unique, C) summed features (accumulated in f32, cast back
    to the caller's dtype).
    """
    inv_idx = np.asarray(inv_idx, dtype=np.int32)
    n, c = feats.shape

    # Keep bf16 features in bf16 (native MXU path, half the DMA); anything else
    # goes through f32.  Accumulation is always f32.
    feat_dtype = feats.dtype if feats.dtype in (jnp.bfloat16, jnp.float32) else jnp.float32

    # Lane-pad channels; pad/tile the point (contraction) axis and the
    # unique-row (output) axis to MXU-friendly multiples of 128.
    # TODO(synk): for small C (e.g. 32) a native-C feature block (full last dim)
    # would cut feature DMA 4x at the cost of masked in-VMEM accumulate stores.
    c_pad = _round_up(max(c, 1), 128)

    n_pad = _round_up(max(n, 1), 128)
    tn = min(tn, n_pad)
    n_pad = _round_up(n_pad, tn)

    m_pad = _round_up(max(num_unique, 1), 128)
    tm = min(tm, m_pad)
    if m_pad // tm < 2 and m_pad >= 256:
        # Guarantee >= 2 M tiles so both v7x TensorCores get work on the
        # "parallel" grid axis.
        tm = max(128, _round_up(m_pad // 2, 128))
    m_pad = _round_up(m_pad, tm)
    num_m_tiles = m_pad // tm

    # ---- host glue: sort points by destination row so each M tile's points
    # are contiguous, then build the per-(i, k) feature-block table. ----
    order = np.argsort(inv_idx, kind="stable")
    idx_sorted = inv_idx[order]

    tile_lo = np.arange(num_m_tiles, dtype=np.int64) * tm
    starts = np.searchsorted(idx_sorted, tile_lo, side="left")
    ends = np.searchsorted(idx_sorted, tile_lo + tm, side="left")
    start_blk = starts // tn
    end_blk = -(-ends // tn)                                   # ceil-div, exclusive
    nblk = np.where(ends > starts, end_blk - start_blk, 0).astype(np.int32)
    max_kb = int(max(int(nblk.max()) if nblk.size else 0, 1))

    # Flattened (num_m_tiles, max_kb) table of feature-block indices.  Skipped
    # k steps repeat the previous block index, so Pallas re-uses the already
    # fetched block (no redundant DMA) and pl.when skips the compute.
    block_tbl = np.zeros((num_m_tiles, max_kb), dtype=np.int32)
    for i in range(num_m_tiles):
        nb = int(nblk[i])
        if nb > 0:
            block_tbl[i, :nb] = start_blk[i] + np.arange(nb)
            block_tbl[i, nb:] = start_blk[i] + nb - 1
    block_tbl_flat = block_tbl.reshape(-1)

    # Padded points carry idx = -1 -> never match any tile-local row.
    idx_pad = np.full((1, n_pad), -1, dtype=np.int32)
    idx_pad[0, :n] = idx_sorted
    feats_sorted = jnp.take(jnp.asarray(feats, feat_dtype),
                            jnp.asarray(order, dtype=jnp.int32), axis=0)
    feat_pad = jnp.zeros((n_pad, c_pad), feat_dtype).at[:n, :c].set(feats_sorted)

    kb = max_kb  # static closure value for the index maps

    def _idx_map(i, k, tbl, nblk_r):
        return (0, tbl[i * kb + k])

    def _feat_map(i, k, tbl, nblk_r):
        return (tbl[i * kb + k], 0)

    def _out_map(i, k, tbl, nblk_r):
        return (i, 0)

    grid = (num_m_tiles, max_kb)
    out = pl.pallas_call(
        _scatter_add_kernel,
        out_shape=jax.ShapeDtypeStruct((m_pad, c_pad), jnp.float32),
        grid_spec=pltpu.PrefetchScalarGridSpec(
            num_scalar_prefetch=2,
            grid=grid,
            in_specs=[
                pl.BlockSpec((1, tn), _idx_map),            # point->row indices
                pl.BlockSpec((tn, c_pad), _feat_map),       # point features
            ],
            out_specs=pl.BlockSpec((tm, c_pad), _out_map),
        ),
        compiler_params=pltpu.CompilerParams(
            dimension_semantics=("parallel", "arbitrary")),
    )(jnp.asarray(block_tbl_flat), jnp.asarray(nblk),
      jnp.asarray(idx_pad), feat_pad)

    return out[:num_unique, :c].astype(feats.dtype)


# ---------------------------------------------------------------------------
# Module wrapper
# ---------------------------------------------------------------------------
class CustomInputLayer:
    def __init__(self, mode: int = 3):
        assert mode == 3, "only mode=3 (sum duplicate features) implemented"
        self.mode = mode

    def __call__(self, coords, features, spatial_size, batch_size: int = 0):
        spatial_size_np = np.asarray(spatial_size, dtype=np.int64)
        dimension = len(spatial_size_np)

        if len(coords) == 0:
            return None

        coords_np = np.asarray(coords, dtype=np.int64)     # (N, dim+1), last col = batch idx
        feats = jnp.asarray(features)                      # (N, C), dtype preserved
        if feats.dtype not in (jnp.float32, jnp.bfloat16):
            feats = feats.astype(jnp.float32)

        # ---- glue: linearize coords and dedup in first-occurrence order ----
        # TODO(synk): this mirrors scn's host-side C++ hash map; the unique-row
        # count is data-dependent so it cannot be a static-shape device op.
        strides = np.ones(dimension, dtype=np.int64)
        for d in range(dimension - 2, -1, -1):
            strides[d] = strides[d + 1] * spatial_size_np[d + 1]
        lin = coords_np[:, :dimension] @ strides
        key = coords_np[:, dimension] * int(np.prod(spatial_size_np)) + lin

        uniq, first_pos, inv = np.unique(key, return_index=True, return_inverse=True)
        order = np.argsort(first_pos, kind="stable")        # first-occurrence order
        rank = np.empty_like(order)
        rank[order] = np.arange(len(order))
        inv_first = rank[inv].astype(np.int32)              # point -> output row
        num_unique = int(len(uniq))

        sparse_features = scatter_add_pallas(inv_first, feats, num_unique)

        return SparseTensor(metadata=None,
                            spatial_size=jnp.asarray(spatial_size_np),
                            features=sparse_features)


# ---------------------------------------------------------------------------
if __name__ == "__main__":
    key = jax.random.PRNGKey(0)
    k_coord, k_batch, k_feat = jax.random.split(key, 3)

    spatial_size = [16, 16, 16]
    dimension = len(spatial_size)
    batch_size = 2
    n_points, channels = 24, 32

    sp_coords = jax.random.randint(k_coord, (n_points, dimension), 0, 16, dtype=jnp.int32)
    b_idx = jax.random.randint(k_batch, (n_points, 1), 0, batch_size, dtype=jnp.int32)
    coords = jnp.concatenate([sp_coords, b_idx], axis=1)          # (N, dim+1)
    # force some exact duplicates so mode=3 summation actually matters
    coords = coords.at[5].set(coords[0]).at[11].set(coords[0]).at[17].set(coords[3])
    features = jax.random.normal(k_feat, (n_points, channels), dtype=jnp.float32)

    layer = CustomInputLayer(mode=3)
    out = layer(coords, features, spatial_size, batch_size=batch_size)
    jax.block_until_ready(out.features)

    # ---- reference check (pure numpy, first-occurrence dedup + sum) ----
    coords_np = np.asarray(coords)
    feats_np = np.asarray(features)
    seen = {}
    ref_rows = []
    for i in range(n_points):
        k_t = tuple(coords_np[i].tolist())
        if k_t not in seen:
            seen[k_t] = len(ref_rows)
            ref_rows.append(np.zeros(channels, np.float32))
        ref_rows[seen[k_t]] += feats_np[i]
    ref = np.stack(ref_rows, axis=0)

    got = np.asarray(out.features)
    assert got.shape == ref.shape, (got.shape, ref.shape)
    np.testing.assert_allclose(got, ref, rtol=1e-5, atol=1e-5)

    print("KERNEL_OK")
</pallas_src>

<mosaic_0001>
module attributes {stable_mosaic.version = 11 : i64} {
  func.func @_scatter_add_kernel(%arg0: i32, %arg1: i32, %arg2: memref<1xi32, #tpu.memory_space<smem>>, %arg3: memref<1xi32, #tpu.memory_space<smem>>, %arg4: memref<1x128xi32, #tpu.memory_space<vmem>>, %arg5: memref<128x128xf32, #tpu.memory_space<vmem>>, %arg6: memref<128x128xf32, #tpu.memory_space<vmem>>) attributes {dimension_semantics = [#tpu.dimension_semantics<parallel>, #tpu.dimension_semantics<arbitrary>], iteration_bounds = array<i64: 1, 1>, scalar_prefetch = 2 : i64, scratch_operands = 0 : i64, tpu.core_type = #tpu.core_type<tc>, window_params = [{transform_indices = @transform_0, window_bounds = array<i64: 1, 128>}, {transform_indices = @transform_1, window_bounds = array<i64: 128, 128>}, {transform_indices = @transform_2, window_bounds = array<i64: 128, 128>}]} {
    %c0_i32 = arith.constant 0 : i32
    %0 = arith.cmpi eq, %arg1, %c0_i32 : i32
    %1 = arith.extui %0 : i1 to i32
    %c0_i32_0 = arith.constant 0 : i32
    %2 = arith.cmpi ne, %1, %c0_i32_0 : i32
    scf.if %2 {
      %cst = arith.constant 0.000000e+00 : f32
      %8 = vector.broadcast %cst : f32 to vector<128x128xf32>
      %c0 = arith.constant 0 : index
      %c0_2 = arith.constant 0 : index
      %9 = vector.load %arg6[%c0, %c0_2] : memref<128x128xf32, #tpu.memory_space<vmem>>, vector<128x128xf32>
      tpu.vector_store %arg6[%c0, %c0_2], %8 {strides = array<i32>} : memref<128x128xf32, #tpu.memory_space<vmem>>, vector<128x128xf32>,
    } else {
    }
    %3 = arith.index_cast %arg0 : i32 to index
    %4 = memref.load %arg3[%3] : memref<1xi32, #tpu.memory_space<smem>>
    %5 = arith.cmpi slt, %arg1, %4 : i32
    %6 = arith.extui %5 : i1 to i32
    %c0_i32_1 = arith.constant 0 : i32
    %7 = arith.cmpi ne, %6, %c0_i32_1 : i32
    scf.if %7 {
      %8 = tpu.iota {dimensions = array<i32: 0>} : vector<128x128xi32>
      %c0 = arith.constant 0 : index
      %c0_2 = arith.constant 0 : index
      %9 = vector.load %arg4[%c0, %c0_2] : memref<1x128xi32, #tpu.memory_space<vmem>>, vector<1x128xi32>
      %c128_i32 = arith.constant 128 : i32
      %10 = arith.muli %arg0, %c128_i32 : i32
      %11 = vector.broadcast %10 : i32 to vector<1x128xi32>
      %12 = arith.subi %9, %11 : vector<1x128xi32>
      %13 = vector.broadcast %12 : vector<1x128xi32> to vector<128x128xi32>
      %14 = arith.cmpi eq, %8, %13 : vector<128x128xi32>
      %15 = arith.extui %14 : vector<128x128xi1> to vector<128x128xi32>
      %16 = arith.sitofp %15 : vector<128x128xi32> to vector<128x128xf32>
      %c0_3 = arith.constant 0 : index
      %c0_4 = arith.constant 0 : index
      %17 = vector.load %arg6[%c0_3, %c0_4] : memref<128x128xf32, #tpu.memory_space<vmem>>, vector<128x128xf32>
      %c0_5 = arith.constant 0 : index
      %c0_6 = arith.constant 0 : index
      %18 = vector.load %arg5[%c0_5, %c0_6] : memref<128x128xf32, #tpu.memory_space<vmem>>, vector<128x128xf32>
      %cst = arith.constant dense<0.000000e+00> : vector<128x128xf32>
      %19 = tpu.matmul %16, %18, %cst {dimension_numbers = #tpu.dot_dimension_numbers<[1], [0], [0], [1], [0, 0, 1, 1], [], []>} : vector<128x128xf32>, vector<128x128xf32>, vector<128x128xf32> -> vector<128x128xf32>
      %20 = arith.addf %17, %19 : vector<128x128xf32>
      %c0_7 = arith.constant 0 : index
      %c0_8 = arith.constant 0 : index
      %21 = vector.load %arg6[%c0_7, %c0_8] : memref<128x128xf32, #tpu.memory_space<vmem>>, vector<128x128xf32>
      tpu.vector_store %arg6[%c0_7, %c0_8], %20 {strides = array<i32>} : memref<128x128xf32, #tpu.memory_space<vmem>>, vector<128x128xf32>,
    } else {
    }
    return
  }
  func.func @transform_0(%arg0: i32, %arg1: i32, %arg2: memref<1xi32, #tpu.memory_space<smem>>, %arg3: memref<1xi32, #tpu.memory_space<smem>>) -> (i32, i32) {
    %c1_i32 = arith.constant 1 : i32
    %0 = arith.muli %arg0, %c1_i32 : i32
    %1 = arith.addi %0, %arg1 : i32
    %2 = arith.index_cast %1 : i32 to index
    %3 = memref.load %arg2[%2] : memref<1xi32, #tpu.memory_space<smem>>
    %c0_i32 = arith.constant 0 : i32
    %c0_i32_0 = arith.constant 0 : i32
    return %c0_i32, %3 : i32, i32
  }
  func.func @transform_1(%arg0: i32, %arg1: i32, %arg2: memref<1xi32, #tpu.memory_space<smem>>, %arg3: memref<1xi32, #tpu.memory_space<smem>>) -> (i32, i32) {
    %c1_i32 = arith.constant 1 : i32
    %0 = arith.muli %arg0, %c1_i32 : i32
    %1 = arith.addi %0, %arg1 : i32
    %2 = arith.index_cast %1 : i32 to index
    %3 = memref.load %arg2[%2] : memref<1xi32, #tpu.memory_space<smem>>
    %c0_i32 = arith.constant 0 : i32
    %c0_i32_0 = arith.constant 0 : i32
    return %3, %c0_i32 : i32, i32
  }
  func.func @transform_2(%arg0: i32, %arg1: i32, %arg2: memref<1xi32, #tpu.memory_space<smem>>, %arg3: memref<1xi32, #tpu.memory_space<smem>>) -> (i32, i32) {
    %c0_i32 = arith.constant 0 : i32
    %c0_i32_0 = arith.constant 0 : i32
    return %arg0, %c0_i32 : i32, i32
  }
}

</mosaic_0001>

<llo_original>
// kernel: tpu_custom_call.1
$region0: #{tpu_custom_call.1}
  #allocation0 [shape = 'u32[]', space=smem, size = 0x4, offset = 0x4, fixed_abs, tag = 'smem constant byte address 0x4 - core index']
  #allocation1 [shape = 'u32[144,128]{1,0:T(1,128)}', space=vmem, size = 0x12000, scoped, tag = 'internal scratch']
  #allocation2 [shape = 's32[1]{0}', space=sflag, size = 0x4, scoped, tag = 'scoped memory for tpu_custom_call.1']
  #allocation3 [shape = 's32[1]{0:T(128)S(6)}', space=smem, size = 0x200, scoped, tag = 'prefetched SMEM operand 0']
  #allocation4 [shape = 's32[1]{0:T(128)S(6)}', space=smem, size = 0x200, scoped, tag = 'prefetched SMEM operand 1']
  %s0 = inlined_call_operand.<no memory space> [shape: s32[1], index: 0, kind: input, shape index: {}]
  %s1 = inlined_call_operand.<no memory space> [shape: s32[1], index: 1, kind: input, shape index: {}]
  %s2 = inlined_call_operand.vmem [shape: s32[1,128], index: 2, kind: input, shape index: {}]
  %s3 = inlined_call_operand.hbm [shape: f32[128,128], index: 3, kind: input, shape index: {}]
  %s4 = inlined_call_operand.hbm [shape: f32[128,128], index: 4, kind: output, shape index: {}]
  %s5 = sld [smem:[#allocation0]]
  $region30: #{tpu_custom_call.1} parent=0
    _
  %s7 = ssub.s32 1, %s5
  %s8 = scalar_select 0, %s7, %s5
  %9 = sst [smem:[#allocation3]] %s0
  %10 = sst [smem:[#allocation4]] %s1
  $region1: #{tpu_custom_call.1} parent=0
    #allocation5 [shape = 'u8[65536]{0}', space=vmem, size = 0x10000, scoped, tag = 'input window, operand 3, single buffered']
    #allocation6 [shape = 's32[1]{0}', space=sflag, size = 0x4, scoped, tag = 'scoped memory for tpu_custom_call.1']
    #allocation7 [shape = 's32[1]{0}', space=sflag, size = 0x4, scoped, tag = 'scoped memory for tpu_custom_call.1']
    #allocation8 [shape = 'u8[65536]{0}', space=vmem, size = 0x10000, scoped, tag = 'output window, operand 0, single buffered']
    %11 = vsyncpa [#allocation6], 0
    %12 = vsyncpa [#allocation7], 0
    // Predicated region
    $region2: #{tpu_custom_call.1} parent=1 // pred_check
      _
    $region3: #{tpu_custom_call.1} parent=1 // pred_check_branch
      %14 = sbr.rel (0) target = $region5
    $region4: #{tpu_custom_call.1} parent=1 // pred_region
      %s15 = sadd.s32 0, 0
      %s16 = sld [smem:[#allocation3 + %s15]]
      %p17 = scmp.lt.s32.totalorder %s16, 0
      %s18 = scalar_select %p17, %s16, 0
      %s19 = scalar_lea.vmem %s2, %s18
      %s20 = sadd.s32 0, 0
      %s21 = sld [smem:[#allocation3 + %s20]]
    $region5: #{tpu_custom_call.1} parent=1 // pred_fallthru
      _
    // Predicated region
    $region6: #{tpu_custom_call.1} parent=1 // pred_check
      _
    $region7: #{tpu_custom_call.1} parent=1 // pred_check_branch
      %23 = sbr.rel (0) target = $region9
    $region8: #{tpu_custom_call.1} parent=1 // pred_region
      %s24 = sadd.s32 0, 0
      %s25 = sld [smem:[#allocation3 + %s24]]
      %s26 = smul.u32 16, %s25
      %s28 = ssub.s32 2048, 2048
      %29 = vsyncadd [#allocation6], %s28
      %s30 = smul.addr %s26, 128
      %s31 = scalar_lea.hbm %s3, %s30
      %s32 = sshll.u32 [#allocation5], 4
      %s33 = int_to_ptr.vmem [resolvable:$true] %s32
      %38 = dma.hbm_to_vmem [thread:$0]  %s31, 2048, %s33, [#allocation6], 128, 128, 8
    $region9: #{tpu_custom_call.1} parent=1 // pred_fallthru
      _
    // Predicated region
    $region10: #{tpu_custom_call.1} parent=1 // pred_check
      _
    $region11: #{tpu_custom_call.1} parent=1 // pred_check_branch
      %40 = sbr.rel (0) target = $region13
    $region12: #{tpu_custom_call.1} parent=1 // pred_region
      %41 = dma.done [#allocation6], 2048
    $region13: #{tpu_custom_call.1} parent=1 // pred_fallthru
      _
    %s42 = sadd.s32 0, 0
    %s43 = sld [smem:[#allocation3 + %s42]]
    %p44 = scmp.lt.s32.totalorder %s43, 0
    %s45 = scalar_select %p44, %s43, 0
    %s46 = scalar_lea.vmem %s2, %s45
    %s47 = sadd.s32 0, 0
    %s48 = sld [smem:[#allocation3 + %s47]]
    %p49 = scmp.lt.s32.totalorder %s48, 0
    %s50 = scalar_select %p49, %s48, 0
    %s51 = scalar_lea.vmem %s2, %s50
    %s52 = sadd.s32 0, 0
    %s53 = sld [smem:[#allocation3 + %s52]]
    %s54 = sadd.s32 0, 0
    %s55 = sld [smem:[#allocation3 + %s54]]
    %s56 = smul.u32 16, %s55
    %p57 = scmp.eq.s32.totalorder 0, 0
    // Predicated region
    $region14: #{tpu_custom_call.1} parent=1 // pred_check
      %p58 = pneg %p57
    $region15: #{tpu_custom_call.1} parent=1 // pred_check_branch
      %60 = sbr.rel (%p58) target = $region17
    $region16: #{tpu_custom_call.1} parent=1 // pred_region
      %61 = vst [vmem:[#allocation8] sm:$0xff] 0.0
      %62 = vst [vmem:[#allocation8 + $0x8] sm:$0xff] 0.0
      %63 = vst [vmem:[#allocation8 + $0x10] sm:$0xff] 0.0
      %64 = vst [vmem:[#allocation8 + $0x18] sm:$0xff] 0.0
      %65 = vst [vmem:[#allocation8 + $0x20] sm:$0xff] 0.0
      %66 = vst [vmem:[#allocation8 + $0x28] sm:$0xff] 0.0
      %67 = vst [vmem:[#allocation8 + $0x30] sm:$0xff] 0.0
      %68 = vst [vmem:[#allocation8 + $0x38] sm:$0xff] 0.0
      %69 = vst [vmem:[#allocation8 + $0x40] sm:$0xff] 0.0
      %70 = vst [vmem:[#allocation8 + $0x48] sm:$0xff] 0.0
      %71 = vst [vmem:[#allocation8 + $0x50] sm:$0xff] 0.0
      %72 = vst [vmem:[#allocation8 + $0x58] sm:$0xff] 0.0
      %73 = vst [vmem:[#allocation8 + $0x60] sm:$0xff] 0.0
      %74 = vst [vmem:[#allocation8 + $0x68] sm:$0xff] 0.0
      %75 = vst [vmem:[#allocation8 + $0x70] sm:$0xff] 0.0
      %76 = vst [vmem:[#allocation8 + $0x78] sm:$0xff] 0.0
    $region17: #{tpu_custom_call.1} parent=1 // pred_fallthru
      _
    %s77 = sld [smem:[#allocation4]]
    %p78 = scmp.lt.s32.totalorder 0, %s77
    // Predicated region
    $region18: #{tpu_custom_call.1} parent=1 // pred_check
      %p79 = pneg %p78
    $region19: #{tpu_custom_call.1} parent=1 // pred_check_branch
      %81 = sbr.rel (%p79) target = $region21
    $region20: #{tpu_custom_call.1} parent=1 // pred_region
      %v82 = vlaneseq
      %v83 = vshrl.u32 %v82, 7
      %v84 = vadd.s32 %v83, 8
      %v85 = vadd.s32 %v83, 16
      %v86 = vadd.s32 %v83, 24
      %v87 = vadd.s32 %v83, 32
      %v88 = vadd.s32 %v83, 40
      %v89 = vadd.s32 %v83, 48
      %v90 = vadd.s32 %v83, 56
      %v91 = vadd.s32 %v83, 64
      %v92 = vadd.s32 %v83, 72
      %v93 = vadd.s32 %v83, 80
      %v94 = vadd.s32 %v83, 88
      %v95 = vadd.s32 %v83, 96
      %v96 = vadd.s32 %v83, 104
      %v97 = vadd.s32 %v83, 112
      %v98 = vadd.s32 %v83, 120
      %v99 = vld [vmem:[%s51] sm:$0x1]
      %s100 = smul.u32 0, 128
      %v101 = vstv %s100
      %v102 = vsub.s32 %v99, %v101
      %v103 = vlaneseq
      %v104 = vshrl.u32 %v103, 7
      %v105 = vsub.s32 0, %v104
      %v106 = vrot.slane %v102, %v105
      %vm107 = vcmp.eq.s32.totalorder %v83, %v106
      %vm108 = vcmp.eq.s32.totalorder %v84, %v106
      %vm109 = vcmp.eq.s32.totalorder %v85, %v106
      %vm110 = vcmp.eq.s32.totalorder %v86, %v106
      %vm111 = vcmp.eq.s32.totalorder %v87, %v106
      %vm112 = vcmp.eq.s32.totalorder %v88, %v106
      %vm113 = vcmp.eq.s32.totalorder %v89, %v106
      %vm114 = vcmp.eq.s32.totalorder %v90, %v106
      %vm115 = vcmp.eq.s32.totalorder %v91, %v106
      %vm116 = vcmp.eq.s32.totalorder %v92, %v106
      %vm117 = vcmp.eq.s32.totalorder %v93, %v106
      %vm118 = vcmp.eq.s32.totalorder %v94, %v106
      %vm119 = vcmp.eq.s32.totalorder %v95, %v106
      %vm120 = vcmp.eq.s32.totalorder %v96, %v106
      %vm121 = vcmp.eq.s32.totalorder %v97, %v106
      %vm122 = vcmp.eq.s32.totalorder %v98, %v106
      %v123 = vsel %vm107, 1, 0
      %v124 = vsel %vm108, 1, 0
      %v125 = vsel %vm109, 1, 0
      %v126 = vsel %vm110, 1, 0
      %v127 = vsel %vm111, 1, 0
      %v128 = vsel %vm112, 1, 0
      %v129 = vsel %vm113, 1, 0
      %v130 = vsel %vm114, 1, 0
      %v131 = vsel %vm115, 1, 0
      %v132 = vsel %vm116, 1, 0
      %v133 = vsel %vm117, 1, 0
      %v134 = vsel %vm118, 1, 0
      %v135 = vsel %vm119, 1, 0
      %v136 = vsel %vm120, 1, 0
      %v137 = vsel %vm121, 1, 0
      %v138 = vsel %vm122, 1, 0
      %v139 = vcvt.s32.f32 %v123
      %v140 = vcvt.s32.f32 %v124
      %v141 = vcvt.s32.f32 %v125
      %v142 = vcvt.s32.f32 %v126
      %v143 = vcvt.s32.f32 %v127
      %v144 = vcvt.s32.f32 %v128
      %v145 = vcvt.s32.f32 %v129
      %v146 = vcvt.s32.f32 %v130
      %v147 = vcvt.s32.f32 %v131
      %v148 = vcvt.s32.f32 %v132
      %v149 = vcvt.s32.f32 %v133
      %v150 = vcvt.s32.f32 %v134
      %v151 = vcvt.s32.f32 %v135
      %v152 = vcvt.s32.f32 %v136
      %v153 = vcvt.s32.f32 %v137
      %v154 = vcvt.s32.f32 %v138
      %v155 = vld [vmem:[#allocation8] sm:$0xff]
      %v156 = vld [vmem:[#allocation8 + $0x8] sm:$0xff]
      %v157 = vld [vmem:[#allocation8 + $0x10] sm:$0xff]
      %v158 = vld [vmem:[#allocation8 + $0x18] sm:$0xff]
      %v159 = vld [vmem:[#allocation8 + $0x20] sm:$0xff]
      %v160 = vld [vmem:[#allocation8 + $0x28] sm:$0xff]
      %v161 = vld [vmem:[#allocation8 + $0x30] sm:$0xff]
      %v162 = vld [vmem:[#allocation8 + $0x38] sm:$0xff]
      %v163 = vld [vmem:[#allocation8 + $0x40] sm:$0xff]
      %v164 = vld [vmem:[#allocation8 + $0x48] sm:$0xff]
      %v165 = vld [vmem:[#allocation8 + $0x50] sm:$0xff]
      %v166 = vld [vmem:[#allocation8 + $0x58] sm:$0xff]
      %v167 = vld [vmem:[#allocation8 + $0x60] sm:$0xff]
      %v168 = vld [vmem:[#allocation8 + $0x68] sm:$0xff]
      %v169 = vld [vmem:[#allocation8 + $0x70] sm:$0xff]
      %v170 = vld [vmem:[#allocation8 + $0x78] sm:$0xff]
      %v171 = vld [vmem:[#allocation5] sm:$0xff]
      %v172 = vld [vmem:[#allocation5 + $0x8] sm:$0xff]
      %v173 = vld [vmem:[#allocation5 + $0x10] sm:$0xff]
      %v174 = vld [vmem:[#allocation5 + $0x18] sm:$0xff]
      %v175 = vld [vmem:[#allocation5 + $0x20] sm:$0xff]
      %v176 = vld [vmem:[#allocation5 + $0x28] sm:$0xff]
      %v177 = vld [vmem:[#allocation5 + $0x30] sm:$0xff]
      %v178 = vld [vmem:[#allocation5 + $0x38] sm:$0xff]
      %v179 = vld [vmem:[#allocation5 + $0x40] sm:$0xff]
      %v180 = vld [vmem:[#allocation5 + $0x48] sm:$0xff]
      %v181 = vld [vmem:[#allocation5 + $0x50] sm:$0xff]
      %v182 = vld [vmem:[#allocation5 + $0x58] sm:$0xff]
      %v183 = vld [vmem:[#allocation5 + $0x60] sm:$0xff]
      %v184 = vld [vmem:[#allocation5 + $0x68] sm:$0xff]
      %v185 = vld [vmem:[#allocation5 + $0x70] sm:$0xff]
      %v186 = vld [vmem:[#allocation5 + $0x78] sm:$0xff]
      %187 = vmatprep.subr.mxu0 0.0
      %188 = vmatpush1.msra.mxu0 %v171
      %189 = vmatprep.subr.mxu0 0.0
      %190 = vmatpush1.msra.mxu0 %v172
      %191 = vmatprep.subr.mxu0 0.0
      %192 = vmatpush1.msra.mxu0 %v173
      %193 = vmatprep.subr.mxu0 0.0
      %194 = vmatpush1.msra.mxu0 %v174
      %195 = vmatprep.subr.mxu0 0.0
      %196 = vmatpush1.msra.mxu0 %v175
      %197 = vmatprep.subr.mxu0 0.0
      %198 = vmatpush1.msra.mxu0 %v176
      %199 = vmatprep.subr.mxu0 0.0
      %200 = vmatpush1.msra.mxu0 %v177
      %201 = vmatprep.subr.mxu0 0.0
      %202 = vmatpush1.msra.mxu0 %v178
      %203 = vmatprep.subr.mxu0 0.0
      %204 = vmatpush1.msra.mxu0 %v179
      %205 = vmatprep.subr.mxu0 0.0
      %206 = vmatpush1.msra.mxu0 %v180
      %207 = vmatprep.subr.mxu0 0.0
      %208 = vmatpush1.msra.mxu0 %v181
      %209 = vmatprep.subr.mxu0 0.0
      %210 = vmatpush1.msra.mxu0 %v182
      %211 = vmatprep.subr.mxu0 0.0
      %212 = vmatpush1.msra.mxu0 %v183
      %213 = vmatprep.subr.mxu0 0.0
      %214 = vmatpush1.msra.mxu0 %v184
      %215 = vmatprep.subr.mxu0 0.0
      %216 = vmatpush1.msra.mxu0 %v185
      %217 = vmatprep.subr.mxu0 0.0
      %218 = vmatpush1.msra.mxu0 %v186
      %219 = vmatprep.subr.mxu0 0.0
      %220 = vmatpush1.msra.mxu0 0.0
      %221 = vmatprep.subr.mxu0 0.0
      %222 = vmatpush1.msra.mxu0 0.0
      %223 = vmatprep.subr.mxu0 0.0
      %224 = vmatpush1.msra.mxu0 0.0
      %225 = vmatprep.subr.mxu0 0.0
      %226 = vmatpush1.msra.mxu0 0.0
      %227 = vmatprep.subr.mxu0 0.0
      %228 = vmatpush1.msra.mxu0 0.0
      %229 = vmatprep.subr.mxu0 0.0
      %230 = vmatpush1.msra.mxu0 0.0
      %231 = vmatprep.subr.mxu0 0.0
      %232 = vmatpush1.msra.mxu0 0.0
      %233 = vmatprep.subr.mxu0 0.0
      %234 = vmatpush1.msra.mxu0 0.0
      %235 = vmatprep.subr.mxu0 0.0
      %236 = vmatpush1.msra.mxu0 0.0
      %237 = vmatprep.subr.mxu0 0.0
      %238 = vmatpush1.msra.mxu0 0.0
      %239 = vmatprep.subr.mxu0 0.0
      %240 = vmatpush1.msra.mxu0 0.0
      %241 = vmatprep.subr.mxu0 0.0
      %242 = vmatpush1.msra.mxu0 0.0
      %243 = vmatprep.subr.mxu0 0.0
      %244 = vmatpush1.msra.mxu0 0.0
      %245 = vmatprep.subr.mxu0 0.0
      %246 = vmatpush1.msra.mxu0 0.0
      %247 = vmatprep.subr.mxu0 0.0
      %248 = vmatpush1.msra.mxu0 0.0
      %249 = vmatprep.subr.mxu0 0.0
      %250 = vmatpush1.msra.mxu0 0.0
      %251 = vmatprep.mubr.f32.mxu0 0.0
      %252 = vmatmul.mubr.f32.gmra.mrb[0].mxu0 %v139
      %v253 = vpop.f32.mrb[0].mxu0
      %v254 = vadd.f32 0.0, %v253
      %v255 = vpop.f32.mrb[0].mxu0
      %256 = vmatprep.mubr.f32.mxu0 0.0
      %257 = vmatmul.mubr.f32.gmra.mrb[0].mxu0 %v140
      %v258 = vpop.f32.mrb[0].mxu0
      %v259 = vadd.f32 0.0, %v258
      %v260 = vpop.f32.mrb[0].mxu0
      %261 = vmatprep.mubr.f32.mxu0 0.0
      %262 = vmatmul.mubr.f32.gmra.mrb[0].mxu0 %v141
      %v263 = vpop.f32.mrb[0].mxu0
      %v264 = vadd.f32 0.0, %v263
      %v265 = vpop.f32.mrb[0].mxu0
      %266 = vmatprep.mubr.f32.mxu0 0.0
      %267 = vmatmul.mubr.f32.gmra.mrb[0].mxu0 %v142
      %v268 = vpop.f32.mrb[0].mxu0
      %v269 = vadd.f32 0.0, %v268
      %v270 = vpop.f32.mrb[0].mxu0
      %271 = vmatprep.mubr.f32.mxu0 0.0
      %272 = vmatmul.mubr.f32.gmra.mrb[0].mxu0 %v143
      %v273 = vpop.f32.mrb[0].mxu0
      %v274 = vadd.f32 0.0, %v273
      %v275 = vpop.f32.mrb[0].mxu0
      %276 = vmatprep.mubr.f32.mxu0 0.0
      %277 = vmatmul.mubr.f32.gmra.mrb[0].mxu0 %v144
      %v278 = vpop.f32.mrb[0].mxu0
      %v279 = vadd.f32 0.0, %v278
      %v280 = vpop.f32.mrb[0].mxu0
      %281 = vmatprep.mubr.f32.mxu0 0.0
      %282 = vmatmul.mubr.f32.gmra.mrb[0].mxu0 %v145
      %v283 = vpop.f32.mrb[0].mxu0
      %v284 = vadd.f32 0.0, %v283
      %v285 = vpop.f32.mrb[0].mxu0
      %286 = vmatprep.mubr.f32.mxu0 0.0
      %287 = vmatmul.mubr.f32.gmra.mrb[0].mxu0 %v146
      %v288 = vpop.f32.mrb[0].mxu0
      %v289 = vadd.f32 0.0, %v288
      %v290 = vpop.f32.mrb[0].mxu0
      %291 = vmatprep.mubr.f32.mxu0 0.0
      %292 = vmatmul.mubr.f32.gmra.mrb[0].mxu0 %v147
      %v293 = vpop.f32.mrb[0].mxu0
      %v294 = vadd.f32 0.0, %v293
      %v295 = vpop.f32.mrb[0].mxu0
      %296 = vmatprep.mubr.f32.mxu0 0.0
      %297 = vmatmul.mubr.f32.gmra.mrb[0].mxu0 %v148
      %v298 = vpop.f32.mrb[0].mxu0
      %v299 = vadd.f32 0.0, %v298
      %v300 = vpop.f32.mrb[0].mxu0
      %301 = vmatprep.mubr.f32.mxu0 0.0
      %302 = vmatmul.mubr.f32.gmra.mrb[0].mxu0 %v149
      %v303 = vpop.f32.mrb[0].mxu0
      %v304 = vadd.f32 0.0, %v303
      %v305 = vpop.f32.mrb[0].mxu0
      %306 = vmatprep.mubr.f32.mxu0 0.0
      %307 = vmatmul.mubr.f32.gmra.mrb[0].mxu0 %v150
      %v308 = vpop.f32.mrb[0].mxu0
      %v309 = vadd.f32 0.0, %v308
      %v310 = vpop.f32.mrb[0].mxu0
      %311 = vmatprep.mubr.f32.mxu0 0.0
      %312 = vmatmul.mubr.f32.gmra.mrb[0].mxu0 %v151
      %v313 = vpop.f32.mrb[0].mxu0
      %v314 = vadd.f32 0.0, %v313
      %v315 = vpop.f32.mrb[0].mxu0
      %316 = vmatprep.mubr.f32.mxu0 0.0
      %317 = vmatmul.mubr.f32.gmra.mrb[0].mxu0 %v152
      %v318 = vpop.f32.mrb[0].mxu0
      %v319 = vadd.f32 0.0, %v318
      %v320 = vpop.f32.mrb[0].mxu0
      %321 = vmatprep.mubr.f32.mxu0 0.0
      %322 = vmatmul.mubr.f32.gmra.mrb[0].mxu0 %v153
      %v323 = vpop.f32.mrb[0].mxu0
      %v324 = vadd.f32 0.0, %v323
      %v325 = vpop.f32.mrb[0].mxu0
      %326 = vmatprep.mubr.f32.mxu0 0.0
      %327 = vmatmul.mubr.f32.gmra.mrb[0].mxu0 %v154
      %v328 = vpop.f32.mrb[0].mxu0
      %v329 = vadd.f32 0.0, %v328
      %v330 = vpop.f32.mrb[0].mxu0
      %331 = vdwg.mxu0
      %v332 = vadd.f32 %v155, %v254
      %v333 = vadd.f32 %v156, %v259
      %v334 = vadd.f32 %v157, %v264
      %v335 = vadd.f32 %v158, %v269
      %v336 = vadd.f32 %v159, %v274
      %v337 = vadd.f32 %v160, %v279
      %v338 = vadd.f32 %v161, %v284
      %v339 = vadd.f32 %v162, %v289
      %v340 = vadd.f32 %v163, %v294
      %v341 = vadd.f32 %v164, %v299
      %v342 = vadd.f32 %v165, %v304
      %v343 = vadd.f32 %v166, %v309
      %v344 = vadd.f32 %v167, %v314
      %v345 = vadd.f32 %v168, %v319
      %v346 = vadd.f32 %v169, %v324
      %v347 = vadd.f32 %v170, %v329
      %348 = vst [vmem:[#allocation8] sm:$0xff] %v332
      %349 = vst [vmem:[#allocation8 + $0x8] sm:$0xff] %v333
      %350 = vst [vmem:[#allocation8 + $0x10] sm:$0xff] %v334
      %351 = vst [vmem:[#allocation8 + $0x18] sm:$0xff] %v335
      %352 = vst [vmem:[#allocation8 + $0x20] sm:$0xff] %v336
      %353 = vst [vmem:[#allocation8 + $0x28] sm:$0xff] %v337
      %354 = vst [vmem:[#allocation8 + $0x30] sm:$0xff] %v338
      %355 = vst [vmem:[#allocation8 + $0x38] sm:$0xff] %v339
      %356 = vst [vmem:[#allocation8 + $0x40] sm:$0xff] %v340
      %357 = vst [vmem:[#allocation8 + $0x48] sm:$0xff] %v341
      %358 = vst [vmem:[#allocation8 + $0x50] sm:$0xff] %v342
      %359 = vst [vmem:[#allocation8 + $0x58] sm:$0xff] %v343
      %360 = vst [vmem:[#allocation8 + $0x60] sm:$0xff] %v344
      %361 = vst [vmem:[#allocation8 + $0x68] sm:$0xff] %v345
      %362 = vst [vmem:[#allocation8 + $0x70] sm:$0xff] %v346
      %363 = vst [vmem:[#allocation8 + $0x78] sm:$0xff] %v347
    $region21: #{tpu_custom_call.1} parent=1 // pred_fallthru
      _
    // Predicated region
    $region22: #{tpu_custom_call.1} parent=1 // pred_check
      _
    $region23: #{tpu_custom_call.1} parent=1 // pred_check_branch
      %365 = sbr.rel (0) target = $region25
    $region24: #{tpu_custom_call.1} parent=1 // pred_region
      %s367 = ssub.s32 2048, 2048
      %368 = vsyncadd [#allocation7], %s367
      %s369 = sshll.u32 [#allocation8], 4
      %s370 = int_to_ptr.vmem [resolvable:$true] %s369
      %375 = dma.vmem_to_hbm [thread:$0]  %s370, 2048, %s4, [#allocation7], 128, 128, 8
    $region25: #{tpu_custom_call.1} parent=1 // pred_fallthru
      _
    // Predicated region
    $region26: #{tpu_custom_call.1} parent=1 // pred_check
      _
    $region27: #{tpu_custom_call.1} parent=1 // pred_check_branch
      %377 = sbr.rel (0) target = $region29
    $region28: #{tpu_custom_call.1} parent=1 // pred_region
      %378 = dma.done [#allocation7], 2048
    $region29: #{tpu_custom_call.1} parent=1 // pred_fallthru
      _
    %379 = vsyncpa [#allocation6], 1
    %380 = vsyncpa [#allocation7], 1

</llo_original>
